<compile_context>
chip_gen: v6e
topology: v6e:2x2x1
jax: 0.10.0
libtpu: 0.0.40
codegen_flags: <defaults>
</compile_context>

<pallas_src>
import jax
import jax.numpy as jnp
from jax.experimental import pallas as pl
from jax.experimental.pallas import tpu as pltpu


def _keypoint_kernel(feat_ref, w_ref, grid_ref, out_ref):
    # feat_ref: (C, HW)  one batch element, bf16 (channels = sublanes, HW = lanes)
    # w_ref   : (P, C)   1x1-conv (heatmap) weight, bf16
    # grid_ref: (2, HW)  f32 rows [grid_x_flat, grid_y_flat]
    # out_ref : (P, 2)   expected [x, y] per keypoint, f32
    feat = feat_ref[...]                                                  # (C, HW)

    # 1x1 conv == channel matmul on the MXU; bf16 inputs, f32 accumulation.
    # Bias deliberately omitted: a per-row constant is a no-op under softmax.
    h = jnp.dot(w_ref[...], feat, preferred_element_type=jnp.float32)    # (P, HW)

    # spatial-softmax numerator only; normalization deferred to a (P, 2) divide
    m = jnp.max(h, axis=-1, keepdims=True)                               # (P, 1)
    e = jnp.exp(h - m)                                                   # (P, HW)

    gx = grid_ref[0:1, :]                                                # (1, HW)
    gy = grid_ref[1:2, :]                                                # (1, HW)

    s = jnp.sum(e, axis=-1, keepdims=True)                               # (P, 1)
    sx = jnp.sum(e * gx, axis=-1, keepdims=True)                         # (P, 1)
    sy = jnp.sum(e * gy, axis=-1, keepdims=True)                         # (P, 1)

    # exact divide (do NOT use approx reciprocal here — tolerance is tight)
    inv = 1.0 / s
    out_ref[...] = jnp.concatenate([sx * inv, sy * inv], axis=-1)        # (P, 2)


def keypoint_head_pallas(feats, hm_w, hm_b=None, *, compute_dtype=jnp.bfloat16):
    """feats: (B, C, H, W); hm_w: (P, C); hm_b: (P,) (unused — see below).
    Returns coords: (B, P, 2) f32 — matches MaskEncoder.forward output."""
    B, C, H, W = feats.shape
    P = hm_w.shape[0]
    HW = H * W

    # The heatmap bias is a per-keypoint constant, exactly cancelled by the
    # spatial softmax -> zero effect on the soft-argmax coordinates.  Dropping
    # it removes a (P, HW) broadcast-add and one input DMA for free.
    del hm_b

    feat_flat = feats.reshape(B, C, HW).astype(compute_dtype)
    w2d = hm_w.astype(compute_dtype)

    # Coordinate table, (2, HW): coords on sublanes, HW lane-dense.  Same values
    # as torch.meshgrid(linspace(0,1,H), linspace(0,1,W)) with 'ij' indexing.
    xs = jnp.linspace(0.0, 1.0, W, dtype=jnp.float32)
    ys = jnp.linspace(0.0, 1.0, H, dtype=jnp.float32)
    gy, gx = jnp.meshgrid(ys, xs, indexing="ij")                         # (H, W)
    grid2 = jnp.stack([gx.reshape(HW), gy.reshape(HW)], axis=0)          # (2, HW)

    bytes_accessed = (
        feat_flat.size * feat_flat.dtype.itemsize
        + w2d.size * w2d.dtype.itemsize
        + grid2.size * 4
        + B * P * 2 * 4
    )
    cost = pl.CostEstimate(
        flops=B * (2 * P * C * HW + 6 * P * HW),
        transcendentals=B * P * HW,
        bytes_accessed=bytes_accessed,
    )

    coords = pl.pallas_call(
        _keypoint_kernel,
        out_shape=jax.ShapeDtypeStruct((B, P, 2), jnp.float32),
        grid_spec=pltpu.PrefetchScalarGridSpec(
            num_scalar_prefetch=0,
            grid=(B,),
            in_specs=[
                # full-dim blocks (C, HW) etc. are exempt from (8,128) rule
                pl.BlockSpec((pl.Squeezed(), C, HW), lambda b: (b, 0, 0)),
                pl.BlockSpec((P, C), lambda b: (0, 0)),
                pl.BlockSpec((2, HW), lambda b: (0, 0)),
            ],
            out_specs=pl.BlockSpec((pl.Squeezed(), P, 2), lambda b: (b, 0, 0)),
        ),
        compiler_params=pltpu.CompilerParams(
            dimension_semantics=("parallel",),  # B=2 shards onto v7x's 2 TCs
        ),
        cost_estimate=cost,
    )(feat_flat, w2d, grid2)

    return coords  # (B, P, 2)


def mask_encoder_forward(x, proj_w, hm_w, hm_b):
    """x: (B, 1, H, W) f32 -> coords (B, P, 2)."""
    # TODO(synk): the smp.DeepLabV3Plus (ResNet18 + ASPP) backbone has no clean
    # Pallas equivalent; a deterministic 1x1-conv projection stands in for it
    # and runs in plain JAX.  Revisit (fuse the keypoint head onto the real
    # backbone's output layout) when the real backbone lands.
    feats = jnp.einsum("ec,bchw->behw", proj_w, x)       # (B, ENC, H, W) f32
    return keypoint_head_pallas(feats, hm_w, hm_b)


def reference_forward(x, proj_w, hm_w, hm_b, *, compute_dtype=jnp.bfloat16):
    """Pure-JAX reference mirroring the PyTorch KeypointHead semantics
    (stand-in projection + heatmap conv (with bias) + softmax + soft-argmax).
    The heatmap conv uses the same bf16 input precision / f32 accumulation as
    the kernel so the comparison is apples-to-apples."""
    feats = jnp.einsum("ec,bchw->behw", proj_w, x)
    B, C, H, W = feats.shape
    h = jnp.einsum(
        "pc,bchw->bphw",
        hm_w.astype(compute_dtype),
        feats.astype(compute_dtype),
        preferred_element_type=jnp.float32,
    )
    h = h + hm_b[None, :, None, None]  # kept: proves softmax invariance of bias
    P = hm_w.shape[0]
    p = jax.nn.softmax(h.reshape(B, P, H * W), axis=-1).reshape(B, P, H, W)
    xs = jnp.linspace(0.0, 1.0, W, dtype=jnp.float32)
    ys = jnp.linspace(0.0, 1.0, H, dtype=jnp.float32)
    gy, gx = jnp.meshgrid(ys, xs, indexing="ij")
    xc = jnp.sum(p * gx[None, None], axis=(2, 3))
    yc = jnp.sum(p * gy[None, None], axis=(2, 3))
    return jnp.stack([xc, yc], axis=-1)


if __name__ == "__main__":
    key = jax.random.PRNGKey(0)
    k_x, k_proj, k_w, k_b = jax.random.split(key, 4)

    # small shapes consistent with the module:
    # batch=2, in_channels=1, img_size(H=W)=16, encoder_dim=32, num_pts=8
    B, Cin, H, W = 2, 1, 16, 16
    ENC, NPTS = 32, 8

    x = jax.random.normal(k_x, (B, Cin, H, W), dtype=jnp.float32)
    proj_w = 0.1 * jax.random.normal(k_proj, (ENC, Cin), dtype=jnp.float32)
    hm_w = 0.1 * jax.random.normal(k_w, (NPTS, ENC), dtype=jnp.float32)
    hm_b = 0.1 * jax.random.normal(k_b, (NPTS,), dtype=jnp.float32)

    coords = jax.block_until_ready(mask_encoder_forward(x, proj_w, hm_w, hm_b))
    ref = jax.block_until_ready(reference_forward(x, proj_w, hm_w, hm_b))

    assert coords.shape == (B, NPTS, 2), coords.shape
    max_err = float(jnp.max(jnp.abs(coords - ref)))
    assert jnp.allclose(coords, ref, rtol=1e-4, atol=1e-5), (
        "mismatch: max abs err = %g" % max_err
    )
    print("KERNEL_OK")
</pallas_src>

<mosaic_0001>
module attributes {stable_mosaic.version = 11 : i64} {
  func.func @_keypoint_kernel(%arg0: i32, %arg1: memref<1x32x256xbf16, #tpu.memory_space<vmem>>, %arg2: memref<8x32xbf16, #tpu.memory_space<vmem>>, %arg3: memref<2x256xf32, #tpu.memory_space<vmem>>, %arg4: memref<1x8x2xf32, #tpu.memory_space<vmem>>) attributes {dimension_semantics = [#tpu.dimension_semantics<parallel>], iteration_bounds = array<i64: 2>, scalar_prefetch = 0 : i64, scratch_operands = 0 : i64, tpu.core_type = #tpu.core_type<tc>, window_params = [{transform_indices = @transform_0, window_bounds = array<i64: 1, 32, 256>}, {pipeline_mode = #tpu.pipeline_mode<synchronous>, transform_indices = @transform_1, window_bounds = array<i64: 8, 32>}, {pipeline_mode = #tpu.pipeline_mode<synchronous>, transform_indices = @transform_2, window_bounds = array<i64: 2, 256>}, {transform_indices = @transform_3, window_bounds = array<i64: 1, 8, 2>}]} {
    %c0 = arith.constant 0 : index
    %c0_0 = arith.constant 0 : index
    %c0_1 = arith.constant 0 : index
    %0 = vector.load %arg1[%c0, %c0_0, %c0_1] : memref<1x32x256xbf16, #tpu.memory_space<vmem>>, vector<1x32x256xbf16>
    %1 = vector.shape_cast %0 : vector<1x32x256xbf16> to vector<32x256xbf16>
    %c0_2 = arith.constant 0 : index
    %c0_3 = arith.constant 0 : index
    %2 = vector.load %arg2[%c0_2, %c0_3] : memref<8x32xbf16, #tpu.memory_space<vmem>>, vector<8x32xbf16>
    %cst = arith.constant dense<0.000000e+00> : vector<8x256xf32>
    %3 = tpu.matmul %2, %1, %cst {dimension_numbers = #tpu.dot_dimension_numbers<[1], [0], [0], [1], [0, 0, 1, 1], [], []>} : vector<8x32xbf16>, vector<32x256xbf16>, vector<8x256xf32> -> vector<8x256xf32>
    %cst_4 = arith.constant dense<0xFF800000> : vector<8xf32>
    %4 = vector.multi_reduction <maximumf>, %3, %cst_4 [1] : vector<8x256xf32> to vector<8xf32>
    %5 = vector.shape_cast %4 : vector<8xf32> to vector<8x1xf32>
    %6 = vector.broadcast %5 : vector<8x1xf32> to vector<8x256xf32>
    %7 = arith.subf %3, %6 : vector<8x256xf32>
    %8 = math.exp %7 : vector<8x256xf32>
    %c0_5 = arith.constant 0 : index
    %c0_6 = arith.constant 0 : index
    %9 = vector.load %arg3[%c0_5, %c0_6] : memref<2x256xf32, #tpu.memory_space<vmem>>, vector<1x256xf32>
    %c1 = arith.constant 1 : index
    %c0_7 = arith.constant 0 : index
    %10 = vector.load %arg3[%c1, %c0_7] : memref<2x256xf32, #tpu.memory_space<vmem>>, vector<1x256xf32>
    %cst_8 = arith.constant dense<0.000000e+00> : vector<8xf32>
    %11 = vector.multi_reduction <add>, %8, %cst_8 [1] : vector<8x256xf32> to vector<8xf32>
    %12 = vector.shape_cast %11 : vector<8xf32> to vector<8x1xf32>
    %13 = vector.broadcast %9 : vector<1x256xf32> to vector<8x256xf32>
    %14 = arith.mulf %8, %13 : vector<8x256xf32>
    %cst_9 = arith.constant dense<0.000000e+00> : vector<8xf32>
    %15 = vector.multi_reduction <add>, %14, %cst_9 [1] : vector<8x256xf32> to vector<8xf32>
    %16 = vector.shape_cast %15 : vector<8xf32> to vector<8x1xf32>
    %17 = vector.broadcast %10 : vector<1x256xf32> to vector<8x256xf32>
    %18 = arith.mulf %8, %17 : vector<8x256xf32>
    %cst_10 = arith.constant dense<0.000000e+00> : vector<8xf32>
    %19 = vector.multi_reduction <add>, %18, %cst_10 [1] : vector<8x256xf32> to vector<8xf32>
    %20 = vector.shape_cast %19 : vector<8xf32> to vector<8x1xf32>
    %cst_11 = arith.constant 1.000000e+00 : f32
    %21 = vector.broadcast %cst_11 : f32 to vector<8x1xf32>
    %22 = arith.divf %21, %12 : vector<8x1xf32>
    %23 = arith.mulf %16, %22 : vector<8x1xf32>
    %24 = arith.mulf %20, %22 : vector<8x1xf32>
    %25 = tpu.concatenate %23, %24 in 1 : vector<8x1xf32>, vector<8x1xf32> -> vector<8x2xf32>
    %c0_12 = arith.constant 0 : index
    %c0_13 = arith.constant 0 : index
    %c0_14 = arith.constant 0 : index
    %26 = vector.load %arg4[%c0_12, %c0_13, %c0_14] : memref<1x8x2xf32, #tpu.memory_space<vmem>>, vector<1x8x2xf32>
    %27 = vector.shape_cast %26 : vector<1x8x2xf32> to vector<8x2xf32>
    %28 = vector.shape_cast %25 : vector<8x2xf32> to vector<1x8x2xf32>
    tpu.vector_store %arg4[%c0_12, %c0_13, %c0_14], %28 {strides = array<i32>} : memref<1x8x2xf32, #tpu.memory_space<vmem>>, vector<1x8x2xf32>,
    return
  }
  func.func @transform_0(%arg0: i32) -> (i32, i32, i32) {
    %c0_i32 = arith.constant 0 : i32
    %c0_i32_0 = arith.constant 0 : i32
    %c0_i32_1 = arith.constant 0 : i32
    return %arg0, %c0_i32, %c0_i32_0 : i32, i32, i32
  }
  func.func @transform_1(%arg0: i32) -> (i32, i32) {
    %c0_i32 = arith.constant 0 : i32
    %c0_i32_0 = arith.constant 0 : i32
    %c0_i32_1 = arith.constant 0 : i32
    return %c0_i32, %c0_i32_0 : i32, i32
  }
  func.func @transform_2(%arg0: i32) -> (i32, i32) {
    %c0_i32 = arith.constant 0 : i32
    %c0_i32_0 = arith.constant 0 : i32
    %c0_i32_1 = arith.constant 0 : i32
    return %c0_i32, %c0_i32_0 : i32, i32
  }
  func.func @transform_3(%arg0: i32) -> (i32, i32, i32) {
    %c0_i32 = arith.constant 0 : i32
    %c0_i32_0 = arith.constant 0 : i32
    %c0_i32_1 = arith.constant 0 : i32
    return %arg0, %c0_i32, %c0_i32_0 : i32, i32, i32
  }
}

</mosaic_0001>

<llo_original>
// kernel: tpu_custom_call.1
$region0: #{tpu_custom_call.1}
  #allocation0 [shape = 'u32[]', space=smem, size = 0x4, offset = 0x4, fixed_abs, tag = 'smem constant byte address 0x4 - core index']
  #allocation1 [shape = 'u32[144,128]{1,0:T(1,128)}', space=vmem, size = 0x12000, scoped, tag = 'internal scratch']
  %s0 = inlined_call_operand.hbm [shape: bf16[2,32,256], index: 0, kind: input, shape index: {}]
  %s1 = inlined_call_operand.hbm [shape: bf16[8,32], index: 1, kind: input, shape index: {}]
  %s2 = inlined_call_operand.hbm [shape: f32[2,256], index: 2, kind: input, shape index: {}]
  %s3 = inlined_call_operand.vmem [shape: f32[2,8,2], index: 3, kind: output, shape index: {}]
  %s4 = sld [smem:[#allocation0]]
  $region57: #{tpu_custom_call.1} parent=0
    _
  %s6 = ssub.s32 1, %s4
  %s7 = scalar_select 0, %s6, %s4
  $region1: #{tpu_custom_call.1} parent=0
    #allocation2 [shape = 'u8[32768]{0}', space=vmem, size = 0x8000, scoped, tag = 'input window, operand 0']
    #allocation3 [shape = 's32[2]{0}', space=sflag, size = 0x8, scoped, tag = 'scoped memory for tpu_custom_call.1']
    #allocation4 [shape = 'u8[2048]{0}', space=vmem, size = 0x800, scoped, tag = 'input window, operand 1, single buffered']
    #allocation5 [shape = 's32[1]{0}', space=sflag, size = 0x4, scoped, tag = 'scoped memory for tpu_custom_call.1']
    #allocation6 [shape = 'u8[2048]{0}', space=vmem, size = 0x800, scoped, tag = 'input window, operand 2, single buffered']
    %8 = vsyncpa [#allocation3], 0
    %s9 = scalar_lea.sflag [#allocation3], 1
    %10 = vsyncpa %s9, 0
    %11 = vsyncpa [#allocation5], 0
    loop: start=0, step=1, limit=4
    $region2: #{tpu_custom_call.1} parent=1 // loop_pre_header
      _
    $region3: #{tpu_custom_call.1} parent=1 // loop_header
      %s13 = sphi 0, %s17
      %p14 = scmp.ge.s32.totalorder %s13, 4
      %s23 = sphi 0, %s25
      %s26 = sphi 0, %s23
      %s27 = sphi 0, %s26
      %s43 = sphi 0, %s27
      %s47 = sphi 0, %s47
      %s49 = sphi 0, %s47
      %s50 = sphi 0, %s49
      %s64 = sphi 0, %s50
      %s68 = sphi 0, %s68
      %s70 = sphi 0, %s68
      %s71 = sphi 0, %s70
      %s85 = sphi 0, %s71
      %s91 = sphi 0, %s93
      %s94 = sphi 0, %s91
      %s95 = sphi 0, %s94
      %s111 = sphi 0, %s95
    $region4: #{tpu_custom_call.1} parent=1 // loop_header_branch
      %16 = sbr.rel (%p14) target = $region8
    $region5: #{tpu_custom_call.1} parent=1 // loop_body
      %s18 = ssub.s32 %s13, 1
      %s19 = ssub.s32 %s13, 2
      %s20 = sadd.s32 %s13, 1
      %s21 = ssub.s32 %s13, %s20
      %p22 = scmp.eq.s32.totalorder %s21, 0
      %s24 = sadd.s32 %s23, 1
      %s25 = scalar_select %p22, %s23, %s24
      %p28 = pneg %p22
      %p29 = scmp.eq.s32.totalorder %s13, 1
      %p30 = por %p28, %p29
      %p31 = scmp.ne.s32.totalorder %s23, %s26
      %p32 = scmp.eq.s32.totalorder %s13, 0
      %p33 = por %p31, %p32
      %p34 = scmp.ne.s32.totalorder %s23, %s26
      %p35 = scmp.eq.s32.totalorder %s18, 1
      %p36 = por %p34, %p35
      %p37 = scmp.ne.s32.totalorder %s26, %s27
      %p38 = scmp.eq.s32.totalorder %s18, 0
      %p39 = por %p37, %p38
      %p40 = scmp.ne.s32.totalorder %s26, %s27
      %p41 = scmp.eq.s32.totalorder %s19, 1
      %p42 = por %p40, %p41
      %p44 = scmp.ne.s32.totalorder %s27, %s43
      %p45 = scmp.eq.s32.totalorder %s19, 0
      %p46 = por %p44, %p45
      %s48 = sadd.s32 %s47, 1
      %p51 = scmp.eq.s32.totalorder %s13, 1
      %p52 = scmp.ne.s32.totalorder %s47, %s49
      %p53 = scmp.eq.s32.totalorder %s13, 0
      %p54 = por %p52, %p53
      %p55 = scmp.ne.s32.totalorder %s47, %s49
      %p56 = scmp.eq.s32.totalorder %s18, 1
      %p57 = por %p55, %p56
      %p58 = scmp.ne.s32.totalorder %s49, %s50
      %p59 = scmp.eq.s32.totalorder %s18, 0
      %p60 = por %p58, %p59
      %p61 = scmp.ne.s32.totalorder %s49, %s50
      %p62 = scmp.eq.s32.totalorder %s19, 1
      %p63 = por %p61, %p62
      %p65 = scmp.ne.s32.totalorder %s50, %s64
      %p66 = scmp.eq.s32.totalorder %s19, 0
      %p67 = por %p65, %p66
      %s69 = sadd.s32 %s68, 1
      %p72 = scmp.eq.s32.totalorder %s13, 1
      %p73 = scmp.ne.s32.totalorder %s68, %s70
      %p74 = scmp.eq.s32.totalorder %s13, 0
      %p75 = por %p73, %p74
      %p76 = scmp.ne.s32.totalorder %s68, %s70
      %p77 = scmp.eq.s32.totalorder %s18, 1
      %p78 = por %p76, %p77
      %p79 = scmp.ne.s32.totalorder %s70, %s71
      %p80 = scmp.eq.s32.totalorder %s18, 0
      %p81 = por %p79, %p80
      %p82 = scmp.ne.s32.totalorder %s70, %s71
      %p83 = scmp.eq.s32.totalorder %s19, 1
      %p84 = por %p82, %p83
      %p86 = scmp.ne.s32.totalorder %s71, %s85
      %p87 = scmp.eq.s32.totalorder %s19, 0
      %p88 = por %p86, %p87
      %s89 = ssub.s32 %s13, %s20
      %p90 = scmp.eq.s32.totalorder %s89, 0
      %s92 = sadd.s32 %s91, 1
      %s93 = scalar_select %p90, %s91, %s92
      %p96 = pneg %p90
      %p97 = scmp.eq.s32.totalorder %s13, 1
      %p98 = por %p96, %p97
      %p99 = scmp.ne.s32.totalorder %s91, %s94
      %p100 = scmp.eq.s32.totalorder %s13, 0
      %p101 = por %p99, %p100
      %p102 = scmp.ne.s32.totalorder %s91, %s94
      %p103 = scmp.eq.s32.totalorder %s18, 1
      %p104 = por %p102, %p103
      %p105 = scmp.ne.s32.totalorder %s94, %s95
      %p106 = scmp.eq.s32.totalorder %s18, 0
      %p107 = por %p105, %p106
      %p108 = scmp.ne.s32.totalorder %s94, %s95
      %p109 = scmp.eq.s32.totalorder %s19, 1
      %p110 = por %p108, %p109
      %p112 = scmp.ne.s32.totalorder %s95, %s111
      %p113 = scmp.eq.s32.totalorder %s19, 0
      %p114 = por %p112, %p113
      %p115 = scmp.le.s32.totalorder 1, %s13
      %p116 = scmp.lt.s32.totalorder %s13, 3
      %p117 = pnand %p115, %p116
      %p118 = pneg %p117
      // Predicated region
      $region9: #{tpu_custom_call.1} parent=5 // pred_check
        _
      $region10: #{tpu_custom_call.1} parent=5 // pred_check_branch
        %120 = sbr.rel (%p117) target = $region12
      $region11: #{tpu_custom_call.1} parent=5 // pred_region
        %s121 = ssub.s32 %s13, 1
        // Predicated region
        $region13: #{tpu_custom_call.1} parent=11 // pred_check
          %p122 = pneg %p60
        $region14: #{tpu_custom_call.1} parent=11 // pred_check_branch
          %124 = sbr.rel (%p122) target = $region16
        $region15: #{tpu_custom_call.1} parent=11 // pred_region
          %s126 = ssub.s32 64, 64
          %127 = vsyncadd [#allocation5], %s126
          %s129 = sshll.u32 [#allocation4], 4
          %s130 = int_to_ptr.vmem [resolvable:$true] %s129
          %132 = dma.hbm_to_vmem [thread:$0]  %s1, 64, %s130, [#allocation5]
        $region16: #{tpu_custom_call.1} parent=11 // pred_fallthru
          _
        // Predicated region
        $region17: #{tpu_custom_call.1} parent=11 // pred_check
          %p133 = pneg %p81
        $region18: #{tpu_custom_call.1} parent=11 // pred_check_branch
          %135 = sbr.rel (%p133) target = $region20
        $region19: #{tpu_custom_call.1} parent=11 // pred_region
          %s137 = ssub.s32 64, 64
          %138 = vsyncadd [#allocation5], %s137
          %s140 = sshll.u32 [#allocation6], 4
          %s141 = int_to_ptr.vmem [resolvable:$true] %s140
          %143 = dma.hbm_to_vmem [thread:$0]  %s2, 64, %s141, [#allocation5]
        $region20: #{tpu_custom_call.1} parent=11 // pred_fallthru
          _
      $region12: #{tpu_custom_call.1} parent=5 // pred_fallthru
        _
      %p144 = scmp.lt.s32.totalorder %s13, 2
      // Predicated region
      $region21: #{tpu_custom_call.1} parent=5 // pred_check
        %p145 = pneg %p144
      $region22: #{tpu_custom_call.1} parent=5 // pred_check_branch
        %147 = sbr.rel (%p145) target = $region24
      $region23: #{tpu_custom_call.1} parent=5 // pred_region
        // Predicated region
        $region25: #{tpu_custom_call.1} parent=23 // pred_check
          %p148 = pneg %p33
        $region26: #{tpu_custom_call.1} parent=23 // pred_check_branch
          %150 = sbr.rel (%p148) target = $region28
        $region27: #{tpu_custom_call.1} parent=23 // pred_region
          %s151 = sand.u32 %s23, 1
          %s152 = scalar_lea.sflag [#allocation3], %s151
          %s153 = sand.u32 %s23, 1
          %s154 = smul.addr %s153, 32
          %s155 = scalar_lea.vmem [#allocation2], %s154
          %s157 = ssub.s32 512, 512
          %158 = vsyncadd %s152, %s157
          %s159 = smul.addr %s13, 8
          %s160 = smul.addr %s159, 64
          %s161 = scalar_lea.hbm %s0, %s160
          %s162 = sshll.u32 %s155, 4
          %s163 = int_to_ptr.vmem [resolvable:$true] %s162
          %168 = dma.hbm_to_vmem [thread:$0]  %s161, 512, %s163, %s152, 128, 128, 8
        $region28: #{tpu_custom_call.1} parent=23 // pred_fallthru
          _
      $region24: #{tpu_custom_call.1} parent=5 // pred_fallthru
        _
      %p169 = scmp.le.s32.totalorder 1, %s13
      %p170 = scmp.lt.s32.totalorder %s13, 3
      %p171 = pnand %p169, %p170
      %p172 = pneg %p171
      // Predicated region
      $region29: #{tpu_custom_call.1} parent=5 // pred_check
        _
      $region30: #{tpu_custom_call.1} parent=5 // pred_check_branch
        %174 = sbr.rel (%p171) target = $region32
      $region31: #{tpu_custom_call.1} parent=5 // pred_region
        %s175 = ssub.s32 %s13, 1
        %s176 = sand.u32 %s26, 1
        %s177 = scalar_lea.sflag [#allocation3], %s176
        %s178 = sand.u32 %s26, 1
        %s179 = smul.addr %s178, 32
        %s180 = scalar_lea.vmem [#allocation2], %s179
        // Predicated region
        $region33: #{tpu_custom_call.1} parent=31 // pred_check
          %p181 = pneg %p39
        $region34: #{tpu_custom_call.1} parent=31 // pred_check_branch
          %183 = sbr.rel (%p181) target = $region36
        $region35: #{tpu_custom_call.1} parent=31 // pred_region
          %184 = dma.done %s177, 512
        $region36: #{tpu_custom_call.1} parent=31 // pred_fallthru
          _
        // Predicated region
        $region37: #{tpu_custom_call.1} parent=31 // pred_check
          %p185 = pneg %p60
        $region38: #{tpu_custom_call.1} parent=31 // pred_check_branch
          %187 = sbr.rel (%p185) target = $region40
        $region39: #{tpu_custom_call.1} parent=31 // pred_region
          %188 = dma.done [#allocation5], 64
        $region40: #{tpu_custom_call.1} parent=31 // pred_fallthru
          _
        // Predicated region
        $region41: #{tpu_custom_call.1} parent=31 // pred_check
          %p189 = pneg %p81
        $region42: #{tpu_custom_call.1} parent=31 // pred_check_branch
          %191 = sbr.rel (%p189) target = $region44
        $region43: #{tpu_custom_call.1} parent=31 // pred_region
          %192 = dma.done [#allocation5], 64
        $region44: #{tpu_custom_call.1} parent=31 // pred_fallthru
          _
        %s193 = sand.u32 %s26, 1
        %s194 = scalar_lea.sflag [#allocation3], %s193
        %s195 = sand.u32 %s26, 1
        %s196 = smul.addr %s195, 32
        %s197 = scalar_lea.vmem [#allocation2], %s196
        %p198 = pneg %p39
        %p199 = pneg %p36
        %p200 = pneg %p60
        %p201 = pneg %p57
        %p202 = pneg %p81
        %p203 = pneg %p78
        %p204 = pneg %p107
        %p205 = pneg %p104
        %p206 = scmp.lt.s32.totalorder %s18, 1
        %s207 = scalar_select %p206, %s18, 1
        %s208 = smul.addr %s207, 8
        %s209 = scalar_lea.vmem %s3, %s208
        %p210 = scmp.lt.s32.totalorder %s18, 1
        %s211 = scalar_select %p210, %s18, 1
        %s212 = smul.addr %s211, 8
        %s213 = scalar_lea.vmem %s3, %s212
        %v215 = vld [vmem:[%s180] sm:$0xff]
        %v216 = vld [vmem:[%s180 + $0x8] sm:$0xff]
        %v217 = vld [vmem:[%s180 + $0x10] sm:$0xff]
        %v218 = vld [vmem:[%s180 + $0x18] sm:$0xff]
        %v219 = vld [vmem:[#allocation4] sm:$0xf]
        %v224 = vunpack.c.l.b16 %v215
        %v225 = vunpack.c.h.b16 %v215
        %v226 = vunpack.c.l.b16 %v216
        %v227 = vunpack.c.h.b16 %v216
        %v228 = vunpack.c.l.b16 %v217
        %v229 = vunpack.c.h.b16 %v217
        %v230 = vunpack.c.l.b16 %v218
        %v231 = vunpack.c.h.b16 %v218
        %v232 = vpack.c.b16 %v226, %v224
        %v233 = vpack.c.b16 %v227, %v225
        %v234 = vpack.c.b16 %v230, %v228
        %v235 = vpack.c.b16 %v231, %v229
        %vm240 = vcmask 261120
        %v242 = vsel %vm240, %v219, 0
        %244 = vmatprep.subr.bf16.mxu0 0
        %245 = vmatpush1.bf16.msra.mxu0 0
        %246 = vmatprep.subr.bf16.mxu0 0
        %247 = vmatpush1.bf16.msra.mxu0 0
        %248 = vmatprep.subr.bf16.mxu0 0
        %249 = vmatpush1.bf16.msra.mxu0 0
        %250 = vmatprep.subr.bf16.mxu0 0
        %251 = vmatpush1.bf16.msra.mxu0 0
        %252 = vmatprep.subr.bf16.mxu0 0
        %253 = vmatpush1.bf16.msra.mxu0 0
        %254 = vmatprep.subr.bf16.mxu0 0
        %255 = vmatpush1.bf16.msra.mxu0 0
        %256 = vmatprep.subr.bf16.mxu0 %v235
        %257 = vmatpush1.bf16.msra.mxu0 %v234
        %258 = vmatprep.subr.bf16.mxu0 %v233
        %259 = vmatpush1.bf16.msra.mxu0 %v232
        %260 = vmatprep.subr.bf16.mxu0 0
        %261 = vmatpush2.bf16.msra.mxu0 0
        %262 = vmatprep.subr.bf16.mxu0 0
        %263 = vmatpush2.bf16.msra.mxu0 0
        %264 = vmatprep.subr.bf16.mxu0 0
        %265 = vmatpush2.bf16.msra.mxu0 0
        %266 = vmatprep.subr.bf16.mxu0 0
        %267 = vmatpush2.bf16.msra.mxu0 0
        %268 = vmatprep.subr.bf16.mxu0 0
        %269 = vmatpush2.bf16.msra.mxu0 0
        %270 = vmatprep.subr.bf16.mxu0 0
        %271 = vmatpush2.bf16.msra.mxu0 0
        %272 = vmatprep.subr.bf16.mxu0 0
        %273 = vmatpush2.bf16.msra.mxu0 0
        %274 = vmatprep.subr.bf16.mxu0 0
        %275 = vmatpush2.bf16.msra.mxu0 0
        %276 = vmatprep.mubr.bf16.mxu0 0
        %277 = vmatmul.mubr.bf16.gmra.mxu0 %v242
        %v278 = vpop.f32.mrf.mxu0
        %v279 = vadd.f32 0.0, %v278
        %v280 = vpop.f32.mrf.mxu0
        %v281 = vadd.f32 0.0, %v280
        %v282 = vpop.f32.mrf.mxu0
        %v283 = vpop.f32.mrf.mxu0
        %284 = vdwg.mxu0
        %v285 = vmax.f32 %v279, %v281
        %286 = vmax.xlane.f32.xlu0 %v285
        %v287 = vpop.xlane.xlu0 %286
        %v288 = vsub.f32 %v279, %v287
        %v289 = vsub.f32 %v281, %v287
        %v290 = vmul.f32 %v288, 1.442695
        %v291 = vpow.pop %v290
        %v292 = vmul.f32 %v289, 1.442695
        %v293 = vpow.pop %v292
        %v294 = vld [vmem:[#allocation6] ss:$2 sm:$0x3]
        %s295 = scalar_lea.vmem [#allocation6], 1
        %v296 = vld [vmem:[%s295] ss:$2 sm:$0x3]
        %v297 = vadd.f32 %v291, %v293
        %298 = vadd.xlane.f32.xlu0 %v297
        %v299 = vpop.xlane.xlu0 %298
        %v301 = vlaneseq
        %v302 = vshrl.u32 %v301, 7
        %v303 = vsub.s32 0, %v302
        %v304 = vrot.slane %v294, %v303
        %v305 = vlaneseq
        %v306 = vshrl.u32 %v305, 7
        %v307 = vsub.s32 1, %v306
        %v308 = vrot.slane %v294, %v307
        %v311 = vmul.f32 %v291, %v304
        %v312 = vmul.f32 %v293, %v308
        %v313 = vadd.f32 %v311, %v312
        %314 = vadd.xlane.f32.xlu0 %v313
        %v315 = vpop.xlane.xlu0 %314
        %v317 = vlaneseq
        %v318 = vshrl.u32 %v317, 7
        %v319 = vsub.s32 0, %v318
        %v320 = vrot.slane %v296, %v319
        %v321 = vlaneseq
        %v322 = vshrl.u32 %v321, 7
        %v323 = vsub.s32 1, %v322
        %v324 = vrot.slane %v296, %v323
        %v327 = vmul.f32 %v291, %v320
        %v328 = vmul.f32 %v293, %v324
        %v329 = vadd.f32 %v327, %v328
        %330 = vadd.xlane.f32.xlu0 %v329
        %v331 = vpop.xlane.xlu0 %330
        %v332 = vrcp.pop %v299
        %v333 = vmul.f32 1.0, %v332
        %v334 = vmul.f32 %v315, %v333
        %v335 = vmul.f32 %v331, %v333
        %vm336 = vcmask 7168
        %v337 = vsel %vm336, %v334, %v335
        %vm338 = vcmask 15360
        %339 = vst.msk [vmem:[%s213] sm:$0xff] %vm338, %v337
        %p340 = scmp.lt.s32.totalorder %s18, 1
        %s341 = scalar_select %p340, %s18, 1
        %s342 = smul.addr %s341, 8
        %s343 = scalar_lea.vmem %s3, %s342
        // Predicated region
        $region45: #{tpu_custom_call.1} parent=31 // pred_check
          %p344 = pneg %p104
        $region46: #{tpu_custom_call.1} parent=31 // pred_check_branch
          %346 = sbr.rel (%p344) target = $region48
        $region47: #{tpu_custom_call.1} parent=31 // pred_region
          _
        $region48: #{tpu_custom_call.1} parent=31 // pred_fallthru
          _
      $region32: #{tpu_custom_call.1} parent=5 // pred_fallthru
        _
      %p347 = scmp.le.s32.totalorder 2, %s13
      // Predicated region
      $region49: #{tpu_custom_call.1} parent=5 // pred_check
        %p348 = pneg %p347
      $region50: #{tpu_custom_call.1} parent=5 // pred_check_branch
        %350 = sbr.rel (%p348) target = $region52
      $region51: #{tpu_custom_call.1} parent=5 // pred_region
        %s351 = ssub.s32 %s13, 2
        // Predicated region
        $region53: #{tpu_custom_call.1} parent=51 // pred_check
          %p352 = pneg %p110
        $region54: #{tpu_custom_call.1} parent=51 // pred_check_branch
          %354 = sbr.rel (%p352) target = $region56
        $region55: #{tpu_custom_call.1} parent=51 // pred_region
          %p355 = scmp.lt.s32.totalorder %s19, 1
          %s356 = scalar_select %p355, %s19, 1
          %s357 = smul.addr %s356, 8
          %s358 = scalar_lea.vmem %s3, %s357
        $region56: #{tpu_custom_call.1} parent=51 // pred_fallthru
          _
      $region52: #{tpu_custom_call.1} parent=5 // pred_fallthru
        _
    $region6: #{tpu_custom_call.1} parent=1 // loop_footer
      %s17 = sadd.s32 1, %s13
    $region7: #{tpu_custom_call.1} parent=1 // loop_footer_branch
      %12 = sbr.rel target = $region3
    $region8: #{tpu_custom_call.1} parent=1 // loop_exit
      _
    %359 = vsyncpa [#allocation3], 1
    %s360 = scalar_lea.sflag [#allocation3], 1
    %361 = vsyncpa %s360, 1
    %362 = vsyncpa [#allocation5], 1

</llo_original>
